<compile_context>
chip_gen: v6e
topology: v6e:2x2x1
jax: 0.10.0
libtpu: 0.0.40
codegen_flags: <defaults>
</compile_context>

<pallas_src>
import functools

import jax
import jax.numpy as jnp
from jax.experimental import pallas as pl
from jax.experimental.pallas import tpu as pltpu

_EPS = 1e-6


# ----------------------------- Pallas kernels ----------------------------- #

def _qkv_kernel(x_ref, wq_ref, wk_ref, wv_ref, q_ref, k_ref, v_ref,
                *, matmul_dtype):
    """Row-tiled Q/K/V projection: computed once for the whole sequence."""
    x = x_ref[...].astype(matmul_dtype)                       # [tile_t, D]
    q_ref[...] = jnp.dot(x, wq_ref[...],
                         preferred_element_type=jnp.float32).astype(q_ref.dtype)
    k_ref[...] = jnp.dot(x, wk_ref[...],
                         preferred_element_type=jnp.float32).astype(k_ref.dtype)
    v_ref[...] = jnp.dot(x, wv_ref[...],
                         preferred_element_type=jnp.float32).astype(v_ref.dtype)


def _fused_kernel(x_ref, q_ref, k_ref, v_ref, wo_ref, bo_ref,
                  gy_ref, by_ref, w1_ref, b1_ref, gl_ref, bl_ref,
                  w2t_ref, b2_ref,
                  attn_ref, score_ref,
                  *, matmul_dtype, approx_recip):
    """Attention + out-proj + residual + LN + MLP head for one query-row tile."""
    # ---- attention: softmax(q @ k.T) @ v ------------------------------------
    q = q_ref[...]                                            # [tile_t, Do]
    k = k_ref[...]                                            # [T,  Do]
    energies = jnp.dot(q, k.T, preferred_element_type=jnp.float32)  # [tile_t, T]

    m = jnp.max(energies, axis=-1, keepdims=True)
    e = jnp.exp(energies - m)
    denom = jnp.sum(e, axis=-1, keepdims=True)
    if approx_recip:
        attn = e * pl.reciprocal(denom, approx=True)          # EUP slot
    else:
        attn = e / denom
    attn_ref[...] = attn.astype(attn_ref.dtype)

    wv = jnp.dot(attn.astype(matmul_dtype), v_ref[...],
                 preferred_element_type=jnp.float32)          # [tile_t, Do]
    y_att = jnp.dot(wv.astype(matmul_dtype), wo_ref[...],
                    preferred_element_type=jnp.float32) + bo_ref[...]  # [tile_t, D]

    # ---- residual + LayerNorm + MLP head (dropout == identity in eval) ------
    y = x_ref[...] + y_att
    mu = jnp.mean(y, axis=-1, keepdims=True)
    var = jnp.mean(jnp.square(y - mu), axis=-1, keepdims=True)
    y = (y - mu) * jax.lax.rsqrt(var + _EPS) * gy_ref[...] + by_ref[...]

    h = jnp.dot(y.astype(matmul_dtype), w1_ref[...],
                preferred_element_type=jnp.float32) + b1_ref[...]
    h = jnp.maximum(h, 0.0)

    mu = jnp.mean(h, axis=-1, keepdims=True)
    var = jnp.mean(jnp.square(h - mu), axis=-1, keepdims=True)
    h = (h - mu) * jax.lax.rsqrt(var + _EPS) * gl_ref[...] + bl_ref[...]

    # linear_2 + sigmoid: compute as [1, D] @ [D, tile_t] so the result (and its
    # store) is lane-dense instead of a masked last-dim-1 column write.
    s = jnp.dot(w2t_ref[...], h.astype(matmul_dtype).T,
                preferred_element_type=jnp.float32) + b2_ref[...]      # [1, tile_t]
    score_ref[...] = jax.nn.sigmoid(s)


# ------------------------------- wrapper ---------------------------------- #

def ca_sum_forward(frame_features, params, *, tile_t=None,
                   matmul_dtype=jnp.float32, attn_dtype=jnp.float32,
                   approx_recip=None, vmem_limit_bytes=None):
    """Pallas implementation of CA_SUM.forward (eval mode).

    frame_features: [T, D] float.  Returns (y [1, T], attn_weights [T, T]).
    matmul_dtype=jnp.bfloat16 enables bf16 MXU inputs (v6e/v7x perf mode).
    """
    x = frame_features.astype(jnp.float32)
    T, D = x.shape
    Do = params["wq"].shape[1]

    # Real row tile so the grid has multiple steps (pipelining + megacore).
    # For very long sequences consider tile_t=256 where VMEM allows.
    if tile_t is None:
        tile_t = 128 if (T > 128 and T % 128 == 0) else T
    assert T % tile_t == 0 and (tile_t == T or tile_t % 128 == 0), \
        "tile_t must divide T and be a multiple of 128 (or equal T)"
    n_tiles = T // tile_t

    mm = jnp.dtype(matmul_dtype)
    if approx_recip is None:
        approx_recip = mm != jnp.dtype(jnp.float32)

    # Cast constant matmul operands once on the host side (not per grid step).
    wq = params["wq"].astype(mm)
    wk = params["wk"].astype(mm)
    wv = params["wv"].astype(mm)
    wo = params["wo"].astype(mm)
    w1 = params["w1"].astype(mm)
    w2t = params["w2"].reshape(1, D).astype(mm)       # linear_2 weight as a row
    bo, b1, b2 = params["bo"], params["b1"], params["b2"]
    gy, by, gl, bl = params["gy"], params["by"], params["gl"], params["bl"]

    full = lambda i: (0, 0)
    rows = lambda i: (i, 0)
    cols = lambda i: (0, i)

    cparams = pltpu.CompilerParams(dimension_semantics=("parallel",),
                                   vmem_limit_bytes=vmem_limit_bytes)

    # --- kernel 1: Q/K/V projections (K/V hoisted out of the per-tile loop) ---
    q, k, v = pl.pallas_call(
        functools.partial(_qkv_kernel, matmul_dtype=mm),
        out_shape=(jax.ShapeDtypeStruct((T, Do), mm),
                   jax.ShapeDtypeStruct((T, Do), mm),
                   jax.ShapeDtypeStruct((T, Do), mm)),
        grid=(n_tiles,),
        in_specs=[
            pl.BlockSpec((tile_t, D), rows),   # x rows
            pl.BlockSpec((D, Do), full),       # Wq
            pl.BlockSpec((D, Do), full),       # Wk
            pl.BlockSpec((D, Do), full),       # Wv
        ],
        out_specs=(pl.BlockSpec((tile_t, Do), rows),
                   pl.BlockSpec((tile_t, Do), rows),
                   pl.BlockSpec((tile_t, Do), rows)),
        compiler_params=cparams,
    )(x, wq, wk, wv)

    # --- kernel 2: fused attention + residual + LN + MLP scoring head --------
    attn, scores = pl.pallas_call(
        functools.partial(_fused_kernel, matmul_dtype=mm,
                          approx_recip=approx_recip),
        out_shape=(jax.ShapeDtypeStruct((T, T), attn_dtype),
                   jax.ShapeDtypeStruct((1, T), jnp.float32)),
        grid=(n_tiles,),
        in_specs=[
            pl.BlockSpec((tile_t, D), rows),   # residual x rows
            pl.BlockSpec((tile_t, Do), rows),  # q rows
            pl.BlockSpec((T, Do), full),       # k (full sequence, fetched once)
            pl.BlockSpec((T, Do), full),       # v (full sequence, fetched once)
            pl.BlockSpec((Do, D), full),       # out-proj weight
            pl.BlockSpec((1, D), full),        # out-proj bias
            pl.BlockSpec((1, D), full),        # norm_y gamma
            pl.BlockSpec((1, D), full),        # norm_y beta
            pl.BlockSpec((D, D), full),        # linear_1 weight
            pl.BlockSpec((1, D), full),        # linear_1 bias
            pl.BlockSpec((1, D), full),        # norm_linear gamma
            pl.BlockSpec((1, D), full),        # norm_linear beta
            pl.BlockSpec((1, D), full),        # linear_2 weight (row)
            pl.BlockSpec((1, 1), full),        # linear_2 bias
        ],
        out_specs=(pl.BlockSpec((tile_t, T), rows),   # attention weights tile
                   pl.BlockSpec((1, tile_t), cols)),  # lane-dense score row tile
        compiler_params=cparams,
    )(x, q, k, v, wo, bo, gy, by, w1, b1, gl, bl, w2t, b2)

    return scores, attn          # scores already [1, T] (== y.view(1, -1))


# --------------------------- pure-JAX reference ---------------------------- #

def _layernorm_ref(x, g, b):
    mu = jnp.mean(x, axis=-1, keepdims=True)
    var = jnp.mean(jnp.square(x - mu), axis=-1, keepdims=True)
    return (x - mu) * jax.lax.rsqrt(var + _EPS) * g + b


def ca_sum_reference(x, p):
    q, k, v = x @ p["wq"], x @ p["wk"], x @ p["wv"]
    attn = jax.nn.softmax(q @ k.T, axis=-1)
    y_att = (attn @ v) @ p["wo"] + p["bo"]
    y = _layernorm_ref(x + y_att, p["gy"], p["by"])
    h = jnp.maximum(y @ p["w1"] + p["b1"], 0.0)
    h = _layernorm_ref(h, p["gl"], p["bl"])
    s = jax.nn.sigmoid(h @ p["w2"] + p["b2"])
    return s.reshape(1, -1), attn


# ------------------------ deterministic parameters ------------------------- #

def init_params(key, input_size, output_size):
    ks = jax.random.split(key, 8)
    sc = 0.02
    f32 = jnp.float32
    return {
        # SelfAttention (weights stored pre-transposed as [in, out])
        "wq": jax.random.normal(ks[0], (input_size, output_size), f32) * sc,
        "wk": jax.random.normal(ks[1], (input_size, output_size), f32) * sc,
        "wv": jax.random.normal(ks[2], (input_size, output_size), f32) * sc,
        "wo": jax.random.normal(ks[3], (output_size, input_size), f32) * sc,
        "bo": jax.random.normal(ks[4], (1, input_size), f32) * sc,
        # norm_y / norm_linear (PyTorch LayerNorm default init)
        "gy": jnp.ones((1, input_size), f32),
        "by": jnp.zeros((1, input_size), f32),
        "gl": jnp.ones((1, input_size), f32),
        "bl": jnp.zeros((1, input_size), f32),
        # linear_1, linear_2
        "w1": jax.random.normal(ks[5], (input_size, input_size), f32) * sc,
        "b1": jax.random.normal(ks[6], (1, input_size), f32) * sc,
        "w2": jax.random.normal(ks[7], (input_size, 1), f32) * sc,
        "b2": jnp.zeros((1, 1), f32),
    }


# ---------------------------------- main ----------------------------------- #

if __name__ == "__main__":
    # Small but tiling-exercising shapes: T=256 -> 2 row tiles of 128 (even
    # tile count also shards across the 2 TensorCores on v7x); D=Do=128 keeps
    # every matmul / LayerNorm reduction fully lane-dense.
    T, D = 256, 128

    key = jax.random.PRNGKey(0)
    k_x, k_p = jax.random.split(key)
    frame_features = jax.random.normal(k_x, (T, D), jnp.float32)
    params = init_params(k_p, input_size=D, output_size=D)

    y_ref, attn_ref = ca_sum_reference(frame_features, params)

    # f32 MXU path.
    y, attn = jax.block_until_ready(ca_sum_forward(frame_features, params))
    assert y.shape == (1, T) and attn.shape == (T, T)
    assert jnp.allclose(y, y_ref, atol=1e-4, rtol=1e-4)
    assert jnp.allclose(attn, attn_ref, atol=1e-4, rtol=1e-4)

    # bf16 MXU-input path (v6e/v7x perf mode) -- looser tolerance vs f32 ref.
    y16, attn16 = jax.block_until_ready(
        ca_sum_forward(frame_features, params, matmul_dtype=jnp.bfloat16))
    assert jnp.allclose(y16, y_ref, atol=2e-2, rtol=2e-2)
    assert jnp.allclose(attn16, attn_ref, atol=2e-2, rtol=2e-2)

    print("KERNEL_OK")
</pallas_src>

<mosaic_0001>
module attributes {stable_mosaic.version = 11 : i64} {
  func.func @_qkv_kernel(%arg0: i32, %arg1: memref<128x128xf32, #tpu.memory_space<vmem>>, %arg2: memref<128x128xf32, #tpu.memory_space<vmem>>, %arg3: memref<128x128xf32, #tpu.memory_space<vmem>>, %arg4: memref<128x128xf32, #tpu.memory_space<vmem>>, %arg5: memref<128x128xf32, #tpu.memory_space<vmem>>, %arg6: memref<128x128xf32, #tpu.memory_space<vmem>>, %arg7: memref<128x128xf32, #tpu.memory_space<vmem>>) attributes {dimension_semantics = [#tpu.dimension_semantics<parallel>], iteration_bounds = array<i64: 2>, scalar_prefetch = 0 : i64, scratch_operands = 0 : i64, tpu.core_type = #tpu.core_type<tc>, window_params = [{transform_indices = @transform_0, window_bounds = array<i64: 128, 128>}, {pipeline_mode = #tpu.pipeline_mode<synchronous>, transform_indices = @transform_1, window_bounds = array<i64: 128, 128>}, {pipeline_mode = #tpu.pipeline_mode<synchronous>, transform_indices = @transform_2, window_bounds = array<i64: 128, 128>}, {pipeline_mode = #tpu.pipeline_mode<synchronous>, transform_indices = @transform_3, window_bounds = array<i64: 128, 128>}, {transform_indices = @transform_4, window_bounds = array<i64: 128, 128>}, {transform_indices = @transform_5, window_bounds = array<i64: 128, 128>}, {transform_indices = @transform_6, window_bounds = array<i64: 128, 128>}]} {
    %c0 = arith.constant 0 : index
    %c0_0 = arith.constant 0 : index
    %0 = vector.load %arg1[%c0, %c0_0] : memref<128x128xf32, #tpu.memory_space<vmem>>, vector<128x128xf32>
    %c0_1 = arith.constant 0 : index
    %c0_2 = arith.constant 0 : index
    %1 = vector.load %arg2[%c0_1, %c0_2] : memref<128x128xf32, #tpu.memory_space<vmem>>, vector<128x128xf32>
    %cst = arith.constant dense<0.000000e+00> : vector<128x128xf32>
    %2 = tpu.matmul %0, %1, %cst {dimension_numbers = #tpu.dot_dimension_numbers<[1], [0], [0], [1], [0, 0, 1, 1], [], []>} : vector<128x128xf32>, vector<128x128xf32>, vector<128x128xf32> -> vector<128x128xf32>
    %c0_3 = arith.constant 0 : index
    %c0_4 = arith.constant 0 : index
    %3 = vector.load %arg5[%c0_3, %c0_4] : memref<128x128xf32, #tpu.memory_space<vmem>>, vector<128x128xf32>
    tpu.vector_store %arg5[%c0_3, %c0_4], %2 {strides = array<i32>} : memref<128x128xf32, #tpu.memory_space<vmem>>, vector<128x128xf32>,
    %c0_5 = arith.constant 0 : index
    %c0_6 = arith.constant 0 : index
    %4 = vector.load %arg3[%c0_5, %c0_6] : memref<128x128xf32, #tpu.memory_space<vmem>>, vector<128x128xf32>
    %cst_7 = arith.constant dense<0.000000e+00> : vector<128x128xf32>
    %5 = tpu.matmul %0, %4, %cst_7 {dimension_numbers = #tpu.dot_dimension_numbers<[1], [0], [0], [1], [0, 0, 1, 1], [], []>} : vector<128x128xf32>, vector<128x128xf32>, vector<128x128xf32> -> vector<128x128xf32>
    %c0_8 = arith.constant 0 : index
    %c0_9 = arith.constant 0 : index
    %6 = vector.load %arg6[%c0_8, %c0_9] : memref<128x128xf32, #tpu.memory_space<vmem>>, vector<128x128xf32>
    tpu.vector_store %arg6[%c0_8, %c0_9], %5 {strides = array<i32>} : memref<128x128xf32, #tpu.memory_space<vmem>>, vector<128x128xf32>,
    %c0_10 = arith.constant 0 : index
    %c0_11 = arith.constant 0 : index
    %7 = vector.load %arg4[%c0_10, %c0_11] : memref<128x128xf32, #tpu.memory_space<vmem>>, vector<128x128xf32>
    %cst_12 = arith.constant dense<0.000000e+00> : vector<128x128xf32>
    %8 = tpu.matmul %0, %7, %cst_12 {dimension_numbers = #tpu.dot_dimension_numbers<[1], [0], [0], [1], [0, 0, 1, 1], [], []>} : vector<128x128xf32>, vector<128x128xf32>, vector<128x128xf32> -> vector<128x128xf32>
    %c0_13 = arith.constant 0 : index
    %c0_14 = arith.constant 0 : index
    %9 = vector.load %arg7[%c0_13, %c0_14] : memref<128x128xf32, #tpu.memory_space<vmem>>, vector<128x128xf32>
    tpu.vector_store %arg7[%c0_13, %c0_14], %8 {strides = array<i32>} : memref<128x128xf32, #tpu.memory_space<vmem>>, vector<128x128xf32>,
    return
  }
  func.func @transform_0(%arg0: i32) -> (i32, i32) {
    %c0_i32 = arith.constant 0 : i32
    %c0_i32_0 = arith.constant 0 : i32
    return %arg0, %c0_i32 : i32, i32
  }
  func.func @transform_1(%arg0: i32) -> (i32, i32) {
    %c0_i32 = arith.constant 0 : i32
    %c0_i32_0 = arith.constant 0 : i32
    %c0_i32_1 = arith.constant 0 : i32
    return %c0_i32, %c0_i32_0 : i32, i32
  }
  func.func @transform_2(%arg0: i32) -> (i32, i32) {
    %c0_i32 = arith.constant 0 : i32
    %c0_i32_0 = arith.constant 0 : i32
    %c0_i32_1 = arith.constant 0 : i32
    return %c0_i32, %c0_i32_0 : i32, i32
  }
  func.func @transform_3(%arg0: i32) -> (i32, i32) {
    %c0_i32 = arith.constant 0 : i32
    %c0_i32_0 = arith.constant 0 : i32
    %c0_i32_1 = arith.constant 0 : i32
    return %c0_i32, %c0_i32_0 : i32, i32
  }
  func.func @transform_4(%arg0: i32) -> (i32, i32) {
    %c0_i32 = arith.constant 0 : i32
    %c0_i32_0 = arith.constant 0 : i32
    return %arg0, %c0_i32 : i32, i32
  }
  func.func @transform_5(%arg0: i32) -> (i32, i32) {
    %c0_i32 = arith.constant 0 : i32
    %c0_i32_0 = arith.constant 0 : i32
    return %arg0, %c0_i32 : i32, i32
  }
  func.func @transform_6(%arg0: i32) -> (i32, i32) {
    %c0_i32 = arith.constant 0 : i32
    %c0_i32_0 = arith.constant 0 : i32
    return %arg0, %c0_i32 : i32, i32
  }
}

</mosaic_0001>

<llo_original>
// kernel: tpu_custom_call.1
$region0: #{tpu_custom_call.1}
  #allocation0 [shape = 'u32[]', space=smem, size = 0x4, offset = 0x4, fixed_abs, tag = 'smem constant byte address 0x4 - core index']
  #allocation1 [shape = 'u32[144,128]{1,0:T(1,128)}', space=vmem, size = 0x12000, scoped, tag = 'internal scratch']
  %s0 = inlined_call_operand.hbm [shape: f32[256,128], index: 0, kind: input, shape index: {}]
  %s1 = inlined_call_operand.hbm [shape: f32[128,128], index: 1, kind: input, shape index: {}]
  %s2 = inlined_call_operand.hbm [shape: f32[128,128], index: 2, kind: input, shape index: {}]
  %s3 = inlined_call_operand.hbm [shape: f32[128,128], index: 3, kind: input, shape index: {}]
  %s4 = inlined_call_operand.hbm [shape: f32[256,128], index: 4, kind: output, shape index: {0}]
  %s5 = inlined_call_operand.hbm [shape: f32[256,128], index: 5, kind: output, shape index: {1}]
  %s6 = inlined_call_operand.hbm [shape: f32[256,128], index: 6, kind: output, shape index: {2}]
  %7 = xla_tuple %s4, %s5, %s6
  %s8 = sld [smem:[#allocation0]]
  $region81: #{tpu_custom_call.1} parent=0
    _
  %s10 = ssub.s32 1, %s8
  %s11 = scalar_select 0, %s10, %s8
  $region1: #{tpu_custom_call.1} parent=0
    #allocation2 [shape = 'u8[131072]{0}', space=vmem, size = 0x20000, scoped, tag = 'input window, operand 0']
    #allocation3 [shape = 's32[2]{0}', space=sflag, size = 0x8, scoped, tag = 'scoped memory for tpu_custom_call.1']
    #allocation4 [shape = 's32[2]{0}', space=sflag, size = 0x8, scoped, tag = 'scoped memory for tpu_custom_call.1']
    #allocation5 [shape = 'u8[65536]{0}', space=vmem, size = 0x10000, scoped, tag = 'input window, operand 1, single buffered']
    #allocation6 [shape = 's32[1]{0}', space=sflag, size = 0x4, scoped, tag = 'scoped memory for tpu_custom_call.1']
    #allocation7 [shape = 'u8[65536]{0}', space=vmem, size = 0x10000, scoped, tag = 'input window, operand 2, single buffered']
    #allocation8 [shape = 'u8[65536]{0}', space=vmem, size = 0x10000, scoped, tag = 'input window, operand 3, single buffered']
    #allocation9 [shape = 's32[1]{0}', space=sflag, size = 0x4, scoped, tag = 'scoped memory for tpu_custom_call.1']
    #allocation10 [shape = 'u8[131072]{0}', space=vmem, size = 0x20000, scoped, tag = 'output window, operand 0']
    #allocation11 [shape = 'u8[131072]{0}', space=vmem, size = 0x20000, scoped, tag = 'output window, operand 1']
    #allocation12 [shape = 's32[2]{0}', space=sflag, size = 0x8, scoped, tag = 'scoped memory for tpu_custom_call.1']
    #allocation13 [shape = 'u8[131072]{0}', space=vmem, size = 0x20000, scoped, tag = 'output window, operand 2']
    %12 = vsyncpa [#allocation3], 0
    %s13 = scalar_lea.sflag [#allocation3], 1
    %14 = vsyncpa %s13, 0
    %15 = vsyncpa [#allocation6], 0
    %16 = vsyncpa [#allocation9], 0
    %17 = vsyncpa [#allocation4], 0
    %s18 = scalar_lea.sflag [#allocation4], 1
    %19 = vsyncpa %s18, 0
    %20 = vsyncpa [#allocation12], 0
    %s21 = scalar_lea.sflag [#allocation12], 1
    %22 = vsyncpa %s21, 0
    loop: start=0, step=1, limit=4
    $region2: #{tpu_custom_call.1} parent=1 // loop_pre_header
      _
    $region3: #{tpu_custom_call.1} parent=1 // loop_header
      %s24 = sphi 0, %s28
      %p25 = scmp.ge.s32.totalorder %s24, 4
      %s34 = sphi 0, %s36
      %s37 = sphi 0, %s34
      %s38 = sphi 0, %s37
      %s54 = sphi 0, %s38
      %s58 = sphi 0, %s58
      %s60 = sphi 0, %s58
      %s61 = sphi 0, %s60
      %s75 = sphi 0, %s61
      %s79 = sphi 0, %s79
      %s81 = sphi 0, %s79
      %s82 = sphi 0, %s81
      %s96 = sphi 0, %s82
      %s100 = sphi 0, %s100
      %s102 = sphi 0, %s100
      %s103 = sphi 0, %s102
      %s117 = sphi 0, %s103
      %s123 = sphi 0, %s125
      %s126 = sphi 0, %s123
      %s127 = sphi 0, %s126
      %s143 = sphi 0, %s127
      %s149 = sphi 0, %s151
      %s152 = sphi 0, %s149
      %s153 = sphi 0, %s152
      %s169 = sphi 0, %s153
      %s175 = sphi 0, %s177
      %s178 = sphi 0, %s175
      %s179 = sphi 0, %s178
      %s195 = sphi 0, %s179
    $region4: #{tpu_custom_call.1} parent=1 // loop_header_branch
      %27 = sbr.rel (%p25) target = $region8
    $region5: #{tpu_custom_call.1} parent=1 // loop_body
      %s29 = ssub.s32 %s24, 1
      %s30 = ssub.s32 %s24, 2
      %s31 = sadd.s32 %s24, 1
      %s32 = ssub.s32 %s24, %s31
      %p33 = scmp.eq.s32.totalorder %s32, 0
      %s35 = sadd.s32 %s34, 1
      %s36 = scalar_select %p33, %s34, %s35
      %p39 = pneg %p33
      %p40 = scmp.eq.s32.totalorder %s24, 1
      %p41 = por %p39, %p40
      %p42 = scmp.ne.s32.totalorder %s34, %s37
      %p43 = scmp.eq.s32.totalorder %s24, 0
      %p44 = por %p42, %p43
      %p45 = scmp.ne.s32.totalorder %s34, %s37
      %p46 = scmp.eq.s32.totalorder %s29, 1
      %p47 = por %p45, %p46
      %p48 = scmp.ne.s32.totalorder %s37, %s38
      %p49 = scmp.eq.s32.totalorder %s29, 0
      %p50 = por %p48, %p49
      %p51 = scmp.ne.s32.totalorder %s37, %s38
      %p52 = scmp.eq.s32.totalorder %s30, 1
      %p53 = por %p51, %p52
      %p55 = scmp.ne.s32.totalorder %s38, %s54
      %p56 = scmp.eq.s32.totalorder %s30, 0
      %p57 = por %p55, %p56
      %s59 = sadd.s32 %s58, 1
      %p62 = scmp.eq.s32.totalorder %s24, 1
      %p63 = scmp.ne.s32.totalorder %s58, %s60
      %p64 = scmp.eq.s32.totalorder %s24, 0
      %p65 = por %p63, %p64
      %p66 = scmp.ne.s32.totalorder %s58, %s60
      %p67 = scmp.eq.s32.totalorder %s29, 1
      %p68 = por %p66, %p67
      %p69 = scmp.ne.s32.totalorder %s60, %s61
      %p70 = scmp.eq.s32.totalorder %s29, 0
      %p71 = por %p69, %p70
      %p72 = scmp.ne.s32.totalorder %s60, %s61
      %p73 = scmp.eq.s32.totalorder %s30, 1
      %p74 = por %p72, %p73
      %p76 = scmp.ne.s32.totalorder %s61, %s75
      %p77 = scmp.eq.s32.totalorder %s30, 0
      %p78 = por %p76, %p77
      %s80 = sadd.s32 %s79, 1
      %p83 = scmp.eq.s32.totalorder %s24, 1
      %p84 = scmp.ne.s32.totalorder %s79, %s81
      %p85 = scmp.eq.s32.totalorder %s24, 0
      %p86 = por %p84, %p85
      %p87 = scmp.ne.s32.totalorder %s79, %s81
      %p88 = scmp.eq.s32.totalorder %s29, 1
      %p89 = por %p87, %p88
      %p90 = scmp.ne.s32.totalorder %s81, %s82
      %p91 = scmp.eq.s32.totalorder %s29, 0
      %p92 = por %p90, %p91
      %p93 = scmp.ne.s32.totalorder %s81, %s82
      %p94 = scmp.eq.s32.totalorder %s30, 1
      %p95 = por %p93, %p94
      %p97 = scmp.ne.s32.totalorder %s82, %s96
      %p98 = scmp.eq.s32.totalorder %s30, 0
      %p99 = por %p97, %p98
      %s101 = sadd.s32 %s100, 1
      %p104 = scmp.eq.s32.totalorder %s24, 1
      %p105 = scmp.ne.s32.totalorder %s100, %s102
      %p106 = scmp.eq.s32.totalorder %s24, 0
      %p107 = por %p105, %p106
      %p108 = scmp.ne.s32.totalorder %s100, %s102
      %p109 = scmp.eq.s32.totalorder %s29, 1
      %p110 = por %p108, %p109
      %p111 = scmp.ne.s32.totalorder %s102, %s103
      %p112 = scmp.eq.s32.totalorder %s29, 0
      %p113 = por %p111, %p112
      %p114 = scmp.ne.s32.totalorder %s102, %s103
      %p115 = scmp.eq.s32.totalorder %s30, 1
      %p116 = por %p114, %p115
      %p118 = scmp.ne.s32.totalorder %s103, %s117
      %p119 = scmp.eq.s32.totalorder %s30, 0
      %p120 = por %p118, %p119
      %s121 = ssub.s32 %s24, %s31
      %p122 = scmp.eq.s32.totalorder %s121, 0
      %s124 = sadd.s32 %s123, 1
      %s125 = scalar_select %p122, %s123, %s124
      %p128 = pneg %p122
      %p129 = scmp.eq.s32.totalorder %s24, 1
      %p130 = por %p128, %p129
      %p131 = scmp.ne.s32.totalorder %s123, %s126
      %p132 = scmp.eq.s32.totalorder %s24, 0
      %p133 = por %p131, %p132
      %p134 = scmp.ne.s32.totalorder %s123, %s126
      %p135 = scmp.eq.s32.totalorder %s29, 1
      %p136 = por %p134, %p135
      %p137 = scmp.ne.s32.totalorder %s126, %s127
      %p138 = scmp.eq.s32.totalorder %s29, 0
      %p139 = por %p137, %p138
      %p140 = scmp.ne.s32.totalorder %s126, %s127
      %p141 = scmp.eq.s32.totalorder %s30, 1
      %p142 = por %p140, %p141
      %p144 = scmp.ne.s32.totalorder %s127, %s143
      %p145 = scmp.eq.s32.totalorder %s30, 0
      %p146 = por %p144, %p145
      %s147 = ssub.s32 %s24, %s31
      %p148 = scmp.eq.s32.totalorder %s147, 0
      %s150 = sadd.s32 %s149, 1
      %s151 = scalar_select %p148, %s149, %s150
      %p154 = pneg %p148
      %p155 = scmp.eq.s32.totalorder %s24, 1
      %p156 = por %p154, %p155
      %p157 = scmp.ne.s32.totalorder %s149, %s152
      %p158 = scmp.eq.s32.totalorder %s24, 0
      %p159 = por %p157, %p158
      %p160 = scmp.ne.s32.totalorder %s149, %s152
      %p161 = scmp.eq.s32.totalorder %s29, 1
      %p162 = por %p160, %p161
      %p163 = scmp.ne.s32.totalorder %s152, %s153
      %p164 = scmp.eq.s32.totalorder %s29, 0
      %p165 = por %p163, %p164
      %p166 = scmp.ne.s32.totalorder %s152, %s153
      %p167 = scmp.eq.s32.totalorder %s30, 1
      %p168 = por %p166, %p167
      %p170 = scmp.ne.s32.totalorder %s153, %s169
      %p171 = scmp.eq.s32.totalorder %s30, 0
      %p172 = por %p170, %p171
      %s173 = ssub.s32 %s24, %s31
      %p174 = scmp.eq.s32.totalorder %s173, 0
      %s176 = sadd.s32 %s175, 1
      %s177 = scalar_select %p174, %s175, %s176
      %p180 = pneg %p174
      %p181 = scmp.eq.s32.totalorder %s24, 1
      %p182 = por %p180, %p181
      %p183 = scmp.ne.s32.totalorder %s175, %s178
      %p184 = scmp.eq.s32.totalorder %s24, 0
      %p185 = por %p183, %p184
      %p186 = scmp.ne.s32.totalorder %s175, %s178
      %p187 = scmp.eq.s32.totalorder %s29, 1
      %p188 = por %p186, %p187
      %p189 = scmp.ne.s32.totalorder %s178, %s179
      %p190 = scmp.eq.s32.totalorder %s29, 0
      %p191 = por %p189, %p190
      %p192 = scmp.ne.s32.totalorder %s178, %s179
      %p193 = scmp.eq.s32.totalorder %s30, 1
      %p194 = por %p192, %p193
      %p196 = scmp.ne.s32.totalorder %s179, %s195
      %p197 = scmp.eq.s32.totalorder %s30, 0
      %p198 = por %p196, %p197
      %p199 = scmp.le.s32.totalorder 1, %s24
      %p200 = scmp.lt.s32.totalorder %s24, 3
      %p201 = pnand %p199, %p200
      %p202 = pneg %p201
      // Predicated region
      $region9: #{tpu_custom_call.1} parent=5 // pred_check
        _
      $region10: #{tpu_custom_call.1} parent=5 // pred_check_branch
        %204 = sbr.rel (%p201) target = $region12
      $region11: #{tpu_custom_call.1} parent=5 // pred_region
        %s205 = ssub.s32 %s24, 1
        // Predicated region
        $region13: #{tpu_custom_call.1} parent=11 // pred_check
          %p206 = pneg %p71
        $region14: #{tpu_custom_call.1} parent=11 // pred_check_branch
          %208 = sbr.rel (%p206) target = $region16
        $region15: #{tpu_custom_call.1} parent=11 // pred_region
          %s210 = ssub.s32 2048, 2048
          %211 = vsyncadd [#allocation6], %s210
          %s212 = sshll.u32 [#allocation5], 4
          %s213 = int_to_ptr.vmem [resolvable:$true] %s212
          %218 = dma.hbm_to_vmem [thread:$0]  %s1, 2048, %s213, [#allocation6], 128, 128, 8
        $region16: #{tpu_custom_call.1} parent=11 // pred_fallthru
          _
        // Predicated region
        $region17: #{tpu_custom_call.1} parent=11 // pred_check
          %p219 = pneg %p92
        $region18: #{tpu_custom_call.1} parent=11 // pred_check_branch
          %221 = sbr.rel (%p219) target = $region20
        $region19: #{tpu_custom_call.1} parent=11 // pred_region
          %s223 = ssub.s32 2048, 2048
          %224 = vsyncadd [#allocation6], %s223
          %s225 = sshll.u32 [#allocation7], 4
          %s226 = int_to_ptr.vmem [resolvable:$true] %s225
          %231 = dma.hbm_to_vmem [thread:$0]  %s2, 2048, %s226, [#allocation6], 128, 128, 8
        $region20: #{tpu_custom_call.1} parent=11 // pred_fallthru
          _
        // Predicated region
        $region21: #{tpu_custom_call.1} parent=11 // pred_check
          %p232 = pneg %p113
        $region22: #{tpu_custom_call.1} parent=11 // pred_check_branch
          %234 = sbr.rel (%p232) target = $region24
        $region23: #{tpu_custom_call.1} parent=11 // pred_region
          %s236 = ssub.s32 2048, 2048
          %237 = vsyncadd [#allocation9], %s236
          %s238 = sshll.u32 [#allocation8], 4
          %s239 = int_to_ptr.vmem [resolvable:$true] %s238
          %244 = dma.hbm_to_vmem [thread:$0]  %s3, 2048, %s239, [#allocation9], 128, 128, 8
        $region24: #{tpu_custom_call.1} parent=11 // pred_fallthru
          _
      $region12: #{tpu_custom_call.1} parent=5 // pred_fallthru
        _
      %p245 = scmp.lt.s32.totalorder %s24, 2
      // Predicated region
      $region25: #{tpu_custom_call.1} parent=5 // pred_check
        %p246 = pneg %p245
      $region26: #{tpu_custom_call.1} parent=5 // pred_check_branch
        %248 = sbr.rel (%p246) target = $region28
      $region27: #{tpu_custom_call.1} parent=5 // pred_region
        // Predicated region
        $region29: #{tpu_custom_call.1} parent=27 // pred_check
          %p249 = pneg %p44
        $region30: #{tpu_custom_call.1} parent=27 // pred_check_branch
          %251 = sbr.rel (%p249) target = $region32
        $region31: #{tpu_custom_call.1} parent=27 // pred_region
          %s252 = sand.u32 %s34, 1
          %s253 = scalar_lea.sflag [#allocation3], %s252
          %s254 = sand.u32 %s34, 1
          %s255 = smul.addr %s254, 128
          %s256 = scalar_lea.vmem [#allocation2], %s255
          %s257 = smul.u32 16, %s24
          %s259 = ssub.s32 2048, 2048
          %260 = vsyncadd %s253, %s259
          %s261 = smul.addr %s257, 128
          %s262 = scalar_lea.hbm %s0, %s261
          %s263 = sshll.u32 %s256, 4
          %s264 = int_to_ptr.vmem [resolvable:$true] %s263
          %269 = dma.hbm_to_vmem [thread:$0]  %s262, 2048, %s264, %s253, 128, 128, 8
        $region32: #{tpu_custom_call.1} parent=27 // pred_fallthru
          _
      $region28: #{tpu_custom_call.1} parent=5 // pred_fallthru
        _
      %p270 = scmp.le.s32.totalorder 1, %s24
      %p271 = scmp.lt.s32.totalorder %s24, 3
      %p272 = pnand %p270, %p271
      %p273 = pneg %p272
      // Predicated region
      $region33: #{tpu_custom_call.1} parent=5 // pred_check
        _
      $region34: #{tpu_custom_call.1} parent=5 // pred_check_branch
        %275 = sbr.rel (%p272) target = $region36
      $region35: #{tpu_custom_call.1} parent=5 // pred_region
        %s276 = ssub.s32 %s24, 1
        %s277 = sand.u32 %s37, 1
        %s278 = scalar_lea.sflag [#allocation3], %s277
        %s279 = sand.u32 %s37, 1
        %s280 = smul.addr %s279, 128
        %s281 = scalar_lea.vmem [#allocation2], %s280
        // Predicated region
        $region37: #{tpu_custom_call.1} parent=35 // pred_check
          %p282 = pneg %p50
        $region38: #{tpu_custom_call.1} parent=35 // pred_check_branch
          %284 = sbr.rel (%p282) target = $region40
        $region39: #{tpu_custom_call.1} parent=35 // pred_region
          %285 = dma.done %s278, 2048
        $region40: #{tpu_custom_call.1} parent=35 // pred_fallthru
          _
        // Predicated region
        $region41: #{tpu_custom_call.1} parent=35 // pred_check
          %p286 = pneg %p71
        $region42: #{tpu_custom_call.1} parent=35 // pred_check_branch
          %288 = sbr.rel (%p286) target = $region44
        $region43: #{tpu_custom_call.1} parent=35 // pred_region
          %289 = dma.done [#allocation6], 2048
        $region44: #{tpu_custom_call.1} parent=35 // pred_fallthru
          _
        // Predicated region
        $region45: #{tpu_custom_call.1} parent=35 // pred_check
          %p290 = pneg %p92
        $region46: #{tpu_custom_call.1} parent=35 // pred_check_branch
          %292 = sbr.rel (%p290) target = $region48
        $region47: #{tpu_custom_call.1} parent=35 // pred_region
          %293 = dma.done [#allocation6], 2048
        $region48: #{tpu_custom_call.1} parent=35 // pred_fallthru
          _
        // Predicated region
        $region49: #{tpu_custom_call.1} parent=35 // pred_check
          %p294 = pneg %p113
        $region50: #{tpu_custom_call.1} parent=35 // pred_check_branch
          %296 = sbr.rel (%p294) target = $region52
        $region51: #{tpu_custom_call.1} parent=35 // pred_region
          %297 = dma.done [#allocation9], 2048
        $region52: #{tpu_custom_call.1} parent=35 // pred_fallthru
          _
        %s298 = sand.u32 %s37, 1
        %s299 = scalar_lea.sflag [#allocation3], %s298
        %s300 = sand.u32 %s37, 1
        %s301 = smul.addr %s300, 128
        %s302 = scalar_lea.vmem [#allocation2], %s301
        %p303 = pneg %p50
        %p304 = pneg %p47
        %p305 = pneg %p71
        %p306 = pneg %p68
        %p307 = pneg %p92
        %p308 = pneg %p89
        %p309 = pneg %p113
        %p310 = pneg %p110
        %p311 = pneg %p139
        %p312 = pneg %p136
        %s313 = sand.u32 %s126, 1
        %s314 = scalar_lea.sflag [#allocation4], %s313
        %s315 = sand.u32 %s126, 1
        %s316 = smul.addr %s315, 128
        %s317 = scalar_lea.vmem [#allocation10], %s316
        %p318 = pneg %p165
        %p319 = pneg %p162
        %s320 = sand.u32 %s29, 1
        %s321 = scalar_lea.sflag [#allocation12], %s320
        %s322 = sand.u32 %s152, 1
        %s323 = smul.addr %s322, 128
        %s324 = scalar_lea.vmem [#allocation11], %s323
        %p325 = pneg %p191
        %p326 = pneg %p188
        %s327 = sand.u32 %s29, 1
        %s328 = scalar_lea.sflag [#allocation12], %s327
        %s329 = sand.u32 %s178, 1
        %s330 = smul.addr %s329, 128
        %s331 = scalar_lea.vmem [#allocation13], %s330
        %s332 = smul.u32 16, %s29
        %s333 = smul.u32 16, %s29
        %s334 = smul.u32 16, %s29
        %s335 = smul.u32 16, %s29
        %v336 = vld [vmem:[%s281] sm:$0xff]
        %v337 = vld [vmem:[%s281 + $0x8] sm:$0xff]
        %v338 = vld [vmem:[%s281 + $0x10] sm:$0xff]
        %v339 = vld [vmem:[%s281 + $0x18] sm:$0xff]
        %v340 = vld [vmem:[%s281 + $0x20] sm:$0xff]
        %v341 = vld [vmem:[%s281 + $0x28] sm:$0xff]
        %v342 = vld [vmem:[%s281 + $0x30] sm:$0xff]
        %v343 = vld [vmem:[%s281 + $0x38] sm:$0xff]
        %v344 = vld [vmem:[%s281 + $0x40] sm:$0xff]
        %v345 = vld [vmem:[%s281 + $0x48] sm:$0xff]
        %v346 = vld [vmem:[%s281 + $0x50] sm:$0xff]
        %v347 = vld [vmem:[%s281 + $0x58] sm:$0xff]
        %v348 = vld [vmem:[%s281 + $0x60] sm:$0xff]
        %v349 = vld [vmem:[%s281 + $0x68] sm:$0xff]
        %v350 = vld [vmem:[%s281 + $0x70] sm:$0xff]
        %v351 = vld [vmem:[%s281 + $0x78] sm:$0xff]
        %v352 = vld [vmem:[#allocation5] sm:$0xff]
        %v353 = vld [vmem:[#allocation5 + $0x8] sm:$0xff]
        %v354 = vld [vmem:[#allocation5 + $0x10] sm:$0xff]
        %v355 = vld [vmem:[#allocation5 + $0x18] sm:$0xff]
        %v356 = vld [vmem:[#allocation5 + $0x20] sm:$0xff]
        %v357 = vld [vmem:[#allocation5 + $0x28] sm:$0xff]
        %v358 = vld [vmem:[#allocation5 + $0x30] sm:$0xff]
        %v359 = vld [vmem:[#allocation5 + $0x38] sm:$0xff]
        %v360 = vld [vmem:[#allocation5 + $0x40] sm:$0xff]
        %v361 = vld [vmem:[#allocation5 + $0x48] sm:$0xff]
        %v362 = vld [vmem:[#allocation5 + $0x50] sm:$0xff]
        %v363 = vld [vmem:[#allocation5 + $0x58] sm:$0xff]
        %v364 = vld [vmem:[#allocation5 + $0x60] sm:$0xff]
        %v365 = vld [vmem:[#allocation5 + $0x68] sm:$0xff]
        %v366 = vld [vmem:[#allocation5 + $0x70] sm:$0xff]
        %v367 = vld [vmem:[#allocation5 + $0x78] sm:$0xff]
        %368 = vmatprep.subr.mxu0 0.0
        %369 = vmatpush1.msra.mxu0 %v367
        %370 = vmatprep.subr.mxu0 0.0
        %371 = vmatpush1.msra.mxu0 %v366
        %372 = vmatprep.subr.mxu0 0.0
        %373 = vmatpush1.msra.mxu0 %v365
        %374 = vmatprep.subr.mxu0 0.0
        %375 = vmatpush1.msra.mxu0 %v364
        %376 = vmatprep.subr.mxu0 0.0
        %377 = vmatpush1.msra.mxu0 %v363
        %378 = vmatprep.subr.mxu0 0.0
        %379 = vmatpush1.msra.mxu0 %v362
        %380 = vmatprep.subr.mxu0 0.0
        %381 = vmatpush1.msra.mxu0 %v361
        %382 = vmatprep.subr.mxu0 0.0
        %383 = vmatpush1.msra.mxu0 %v360
        %384 = vmatprep.subr.mxu0 0.0
        %385 = vmatpush1.msra.mxu0 %v359
        %386 = vmatprep.subr.mxu0 0.0
        %387 = vmatpush1.msra.mxu0 %v358
        %388 = vmatprep.subr.mxu0 0.0
        %389 = vmatpush1.msra.mxu0 %v357
        %390 = vmatprep.subr.mxu0 0.0
        %391 = vmatpush1.msra.mxu0 %v356
        %392 = vmatprep.subr.mxu0 0.0
        %393 = vmatpush1.msra.mxu0 %v355
        %394 = vmatprep.subr.mxu0 0.0
        %395 = vmatpush1.msra.mxu0 %v354
        %396 = vmatprep.subr.mxu0 0.0
        %397 = vmatpush1.msra.mxu0 %v353
        %398 = vmatprep.subr.mxu0 0.0
        %399 = vmatpush1.msra.mxu0 %v352
        %400 = vmatprep.subr.mxu0 0.0
        %401 = vmatpush2.msra.mxu0 0.0
        %402 = vmatprep.subr.mxu0 0.0
        %403 = vmatpush2.msra.mxu0 0.0
        %404 = vmatprep.subr.mxu0 0.0
        %405 = vmatpush2.msra.mxu0 0.0
        %406 = vmatprep.subr.mxu0 0.0
        %407 = vmatpush2.msra.mxu0 0.0
        %408 = vmatprep.subr.mxu0 0.0
        %409 = vmatpush2.msra.mxu0 0.0
        %410 = vmatprep.subr.mxu0 0.0
        %411 = vmatpush2.msra.mxu0 0.0
        %412 = vmatprep.subr.mxu0 0.0
        %413 = vmatpush2.msra.mxu0 0.0
        %414 = vmatprep.subr.mxu0 0.0
        %415 = vmatpush2.msra.mxu0 0.0
        %416 = vmatprep.subr.mxu0 0.0
        %417 = vmatpush2.msra.mxu0 0.0
        %418 = vmatprep.subr.mxu0 0.0
        %419 = vmatpush2.msra.mxu0 0.0
        %420 = vmatprep.subr.mxu0 0.0
        %421 = vmatpush2.msra.mxu0 0.0
        %422 = vmatprep.subr.mxu0 0.0
        %423 = vmatpush2.msra.mxu0 0.0
        %424 = vmatprep.subr.mxu0 0.0
        %425 = vmatpush2.msra.mxu0 0.0
        %426 = vmatprep.subr.mxu0 0.0
        %427 = vmatpush2.msra.mxu0 0.0
        %428 = vmatprep.subr.mxu0 0.0
        %429 = vmatpush2.msra.mxu0 0.0
        %430 = vmatprep.subr.mxu0 0.0
        %431 = vmatpush2.msra.mxu0 0.0
        %432 = vmatprep.mubr.f32.mxu0 0.0
        %433 = vmatmul.mubr.f32.gmra.mxu0 %v336
        %v434 = vpop.f32.mrf.mxu0
        %v435 = vadd.f32 0.0, %v434
        %v436 = vpop.f32.mrf.mxu0
        %437 = vmatprep.mubr.f32.mxu0 0.0
        %438 = vmatmul.mubr.f32.gmra.mxu0 %v337
        %v439 = vpop.f32.mrf.mxu0
        %v440 = vadd.f32 0.0, %v439
        %v441 = vpop.f32.mrf.mxu0
        %442 = vmatprep.mubr.f32.mxu0 0.0
        %443 = vmatmul.mubr.f32.gmra.mxu0 %v338
        %v444 = vpop.f32.mrf.mxu0
        %v445 = vadd.f32 0.0, %v444
        %v446 = vpop.f32.mrf.mxu0
        %447 = vmatprep.mubr.f32.mxu0 0.0
        %448 = vmatmul.mubr.f32.gmra.mxu0 %v339
        %v449 = vpop.f32.mrf.mxu0
        %v450 = vadd.f32 0.0, %v449
        %v451 = vpop.f32.mrf.mxu0
        %452 = vmatprep.mubr.f32.mxu0 0.0
        %453 = vmatmul.mubr.f32.gmra.mxu0 %v340
        %v454 = vpop.f32.mrf.mxu0
        %v455 = vadd.f32 0.0, %v454
        %v456 = vpop.f32.mrf.mxu0
        %457 = vmatprep.mubr.f32.mxu0 0.0
        %458 = vmatmul.mubr.f32.gmra.mxu0 %v341
        %v459 = vpop.f32.mrf.mxu0
        %v460 = vadd.f32 0.0, %v459
        %v461 = vpop.f32.mrf.mxu0
        %462 = vmatprep.mubr.f32.mxu0 0.0
        %463 = vmatmul.mubr.f32.gmra.mxu0 %v342
        %v464 = vpop.f32.mrf.mxu0
        %v465 = vadd.f32 0.0, %v464
        %v466 = vpop.f32.mrf.mxu0
        %467 = vmatprep.mubr.f32.mxu0 0.0
        %468 = vmatmul.mubr.f32.gmra.mxu0 %v343
        %v469 = vpop.f32.mrf.mxu0
        %v470 = vadd.f32 0.0, %v469
        %v471 = vpop.f32.mrf.mxu0
        %472 = vmatprep.mubr.f32.mxu0 0.0
        %473 = vmatmul.mubr.f32.gmra.mxu0 %v344
        %v474 = vpop.f32.mrf.mxu0
        %v475 = vadd.f32 0.0, %v474
        %v476 = vpop.f32.mrf.mxu0
        %477 = vmatprep.mubr.f32.mxu0 0.0
        %478 = vmatmul.mubr.f32.gmra.mxu0 %v345
        %v479 = vpop.f32.mrf.mxu0
        %v480 = vadd.f32 0.0, %v479
        %v481 = vpop.f32.mrf.mxu0
        %482 = vmatprep.mubr.f32.mxu0 0.0
        %483 = vmatmul.mubr.f32.gmra.mxu0 %v346
        %v484 = vpop.f32.mrf.mxu0
        %v485 = vadd.f32 0.0, %v484
        %v486 = vpop.f32.mrf.mxu0
        %487 = vmatprep.mubr.f32.mxu0 0.0
        %488 = vmatmul.mubr.f32.gmra.mxu0 %v347
        %v489 = vpop.f32.mrf.mxu0
        %v490 = vadd.f32 0.0, %v489
        %v491 = vpop.f32.mrf.mxu0
        %492 = vmatprep.mubr.f32.mxu0 0.0
        %493 = vmatmul.mubr.f32.gmra.mxu0 %v348
        %v494 = vpop.f32.mrf.mxu0
        %v495 = vadd.f32 0.0, %v494
        %v496 = vpop.f32.mrf.mxu0
        %497 = vmatprep.mubr.f32.mxu0 0.0
        %498 = vmatmul.mubr.f32.gmra.mxu0 %v349
        %v499 = vpop.f32.mrf.mxu0
        %v500 = vadd.f32 0.0, %v499
        %v501 = vpop.f32.mrf.mxu0
        %502 = vmatprep.mubr.f32.mxu0 0.0
        %503 = vmatmul.mubr.f32.gmra.mxu0 %v350
        %v504 = vpop.f32.mrf.mxu0
        %v505 = vadd.f32 0.0, %v504
        %v506 = vpop.f32.mrf.mxu0
        %507 = vmatprep.mubr.f32.mxu0 0.0
        %508 = vmatmul.mubr.f32.gmra.mxu0 %v351
        %v509 = vpop.f32.mrf.mxu0
        %v510 = vadd.f32 0.0, %v509
        %v511 = vpop.f32.mrf.mxu0
        %512 = vdwg.mxu0
        %513 = vst [vmem:[%s317] sm:$0xff] %v435
        %514 = vst [vmem:[%s317 + $0x8] sm:$0xff] %v440
        %515 = vst [vmem:[%s317 + $0x10] sm:$0xff] %v445
        %516 = vst [vmem:[%s317 + $0x18] sm:$0xff] %v450
        %517 = vst [vmem:[%s317 + $0x20] sm:$0xff] %v455
        %518 = vst [vmem:[%s317 + $0x28] sm:$0xff] %v460
        %519 = vst [vmem:[%s317 + $0x30] sm:$0xff] %v465
        %520 = vst [vmem:[%s317 + $0x38] sm:$0xff] %v470
        %521 = vst [vmem:[%s317 + $0x40] sm:$0xff] %v475
        %522 = vst [vmem:[%s317 + $0x48] sm:$0xff] %v480
        %523 = vst [vmem:[%s317 + $0x50] sm:$0xff] %v485
        %524 = vst [vmem:[%s317 + $0x58] sm:$0xff] %v490
        %525 = vst [vmem:[%s317 + $0x60] sm:$0xff] %v495
        %526 = vst [vmem:[%s317 + $0x68] sm:$0xff] %v500
        %527 = vst [vmem:[%s317 + $0x70] sm:$0xff] %v505
        %528 = vst [vmem:[%s317 + $0x78] sm:$0xff] %v510
        %v529 = vld [vmem:[#allocation7] sm:$0xff]
        %v530 = vld [vmem:[#allocation7 + $0x8] sm:$0xff]
        %v531 = vld [vmem:[#allocation7 + $0x10] sm:$0xff]
        %v532 = vld [vmem:[#allocation7 + $0x18] sm:$0xff]
        %v533 = vld [vmem:[#allocation7 + $0x20] sm:$0xff]
        %v534 = vld [vmem:[#allocation7 + $0x28] sm:$0xff]
        %v535 = vld [vmem:[#allocation7 + $0x30] sm:$0xff]
        %v536 = vld [vmem:[#allocation7 + $0x38] sm:$0xff]
        %v537 = vld [vmem:[#allocation7 + $0x40] sm:$0xff]
        %v538 = vld [vmem:[#allocation7 + $0x48] sm:$0xff]
        %v539 = vld [vmem:[#allocation7 + $0x50] sm:$0xff]
        %v540 = vld [vmem:[#allocation7 + $0x58] sm:$0xff]
        %v541 = vld [vmem:[#allocation7 + $0x60] sm:$0xff]
        %v542 = vld [vmem:[#allocation7 + $0x68] sm:$0xff]
        %v543 = vld [vmem:[#allocation7 + $0x70] sm:$0xff]
        %v544 = vld [vmem:[#allocation7 + $0x78] sm:$0xff]
        %545 = vmatprep.subr.mxu0 0.0
        %546 = vmatpush1.msra.mxu0 %v544
        %547 = vmatprep.subr.mxu0 0.0
        %548 = vmatpush1.msra.mxu0 %v543
        %549 = vmatprep.subr.mxu0 0.0
        %550 = vmatpush1.msra.mxu0 %v542
        %551 = vmatprep.subr.mxu0 0.0
        %552 = vmatpush1.msra.mxu0 %v541
        %553 = vmatprep.subr.mxu0 0.0
        %554 = vmatpush1.msra.mxu0 %v540
        %555 = vmatprep.subr.mxu0 0.0
        %556 = vmatpush1.msra.mxu0 %v539
        %557 = vmatprep.subr.mxu0 0.0
        %558 = vmatpush1.msra.mxu0 %v538
        %559 = vmatprep.subr.mxu0 0.0
        %560 = vmatpush1.msra.mxu0 %v537
        %561 = vmatprep.subr.mxu0 0.0
        %562 = vmatpush1.msra.mxu0 %v536
        %563 = vmatprep.subr.mxu0 0.0
        %564 = vmatpush1.msra.mxu0 %v535
        %565 = vmatprep.subr.mxu0 0.0
        %566 = vmatpush1.msra.mxu0 %v534
        %567 = vmatprep.subr.mxu0 0.0
        %568 = vmatpush1.msra.mxu0 %v533
        %569 = vmatprep.subr.mxu0 0.0
        %570 = vmatpush1.msra.mxu0 %v532
        %571 = vmatprep.subr.mxu0 0.0
        %572 = vmatpush1.msra.mxu0 %v531
        %573 = vmatprep.subr.mxu0 0.0
        %574 = vmatpush1.msra.mxu0 %v530
        %575 = vmatprep.subr.mxu0 0.0
        %576 = vmatpush1.msra.mxu0 %v529
        %577 = vmatprep.subr.mxu0 0.0
        %578 = vmatpush2.msra.mxu0 0.0
        %579 = vmatprep.subr.mxu0 0.0
        %580 = vmatpush2.msra.mxu0 0.0
        %581 = vmatprep.subr.mxu0 0.0
        %582 = vmatpush2.msra.mxu0 0.0
        %583 = vmatprep.subr.mxu0 0.0
        %584 = vmatpush2.msra.mxu0 0.0
        %585 = vmatprep.subr.mxu0 0.0
        %586 = vmatpush2.msra.mxu0 0.0
        %587 = vmatprep.subr.mxu0 0.0
        %588 = vmatpush2.msra.mxu0 0.0
        %589 = vmatprep.subr.mxu0 0.0
        %590 = vmatpush2.msra.mxu0 0.0
        %591 = vmatprep.subr.mxu0 0.0
        %592 = vmatpush2.msra.mxu0 0.0
        %593 = vmatprep.subr.mxu0 0.0
        %594 = vmatpush2.msra.mxu0 0.0
        %595 = vmatprep.subr.mxu0 0.0
        %596 = vmatpush2.msra.mxu0 0.0
        %597 = vmatprep.subr.mxu0 0.0
        %598 = vmatpush2.msra.mxu0 0.0
        %599 = vmatprep.subr.mxu0 0.0
        %600 = vmatpush2.msra.mxu0 0.0
        %601 = vmatprep.subr.mxu0 0.0
        %602 = vmatpush2.msra.mxu0 0.0
        %603 = vmatprep.subr.mxu0 0.0
        %604 = vmatpush2.msra.mxu0 0.0
        %605 = vmatprep.subr.mxu0 0.0
        %606 = vmatpush2.msra.mxu0 0.0
        %607 = vmatprep.subr.mxu0 0.0
        %608 = vmatpush2.msra.mxu0 0.0
        %609 = vmatprep.mubr.f32.mxu0 0.0
        %610 = vmatmul.mubr.f32.gmra.mxu0 %v336
        %v611 = vpop.f32.mrf.mxu0
        %v612 = vadd.f32 0.0, %v611
        %v613 = vpop.f32.mrf.mxu0
        %614 = vmatprep.mubr.f32.mxu0 0.0
        %615 = vmatmul.mubr.f32.gmra.mxu0 %v337
        %v616 = vpop.f32.mrf.mxu0
        %v617 = vadd.f32 0.0, %v616
        %v618 = vpop.f32.mrf.mxu0
        %619 = vmatprep.mubr.f32.mxu0 0.0
        %620 = vmatmul.mubr.f32.gmra.mxu0 %v338
        %v621 = vpop.f32.mrf.mxu0
        %v622 = vadd.f32 0.0, %v621
        %v623 = vpop.f32.mrf.mxu0
        %624 = vmatprep.mubr.f32.mxu0 0.0
        %625 = vmatmul.mubr.f32.gmra.mxu0 %v339
        %v626 = vpop.f32.mrf.mxu0
        %v627 = vadd.f32 0.0, %v626
        %v628 = vpop.f32.mrf.mxu0
        %629 = vmatprep.mubr.f32.mxu0 0.0
        %630 = vmatmul.mubr.f32.gmra.mxu0 %v340
        %v631 = vpop.f32.mrf.mxu0
        %v632 = vadd.f32 0.0, %v631
        %v633 = vpop.f32.mrf.mxu0
        %634 = vmatprep.mubr.f32.mxu0 0.0
        %635 = vmatmul.mubr.f32.gmra.mxu0 %v341
        %v636 = vpop.f32.mrf.mxu0
        %v637 = vadd.f32 0.0, %v636
        %v638 = vpop.f32.mrf.mxu0
        %639 = vmatprep.mubr.f32.mxu0 0.0
        %640 = vmatmul.mubr.f32.gmra.mxu0 %v342
        %v641 = vpop.f32.mrf.mxu0
        %v642 = vadd.f32 0.0, %v641
        %v643 = vpop.f32.mrf.mxu0
        %644 = vmatprep.mubr.f32.mxu0 0.0
        %645 = vmatmul.mubr.f32.gmra.mxu0 %v343
        %v646 = vpop.f32.mrf.mxu0
        %v647 = vadd.f32 0.0, %v646
        %v648 = vpop.f32.mrf.mxu0
        %649 = vmatprep.mubr.f32.mxu0 0.0
        %650 = vmatmul.mubr.f32.gmra.mxu0 %v344
        %v651 = vpop.f32.mrf.mxu0
        %v652 = vadd.f32 0.0, %v651
        %v653 = vpop.f32.mrf.mxu0
        %654 = vmatprep.mubr.f32.mxu0 0.0
        %655 = vmatmul.mubr.f32.gmra.mxu0 %v345
        %v656 = vpop.f32.mrf.mxu0
        %v657 = vadd.f32 0.0, %v656
        %v658 = vpop.f32.mrf.mxu0
        %659 = vmatprep.mubr.f32.mxu0 0.0
        %660 = vmatmul.mubr.f32.gmra.mxu0 %v346
        %v661 = vpop.f32.mrf.mxu0
        %v662 = vadd.f32 0.0, %v661
        %v663 = vpop.f32.mrf.mxu0
        %664 = vmatprep.mubr.f32.mxu0 0.0
        %665 = vmatmul.mubr.f32.gmra.mxu0 %v347
        %v666 = vpop.f32.mrf.mxu0
        %v667 = vadd.f32 0.0, %v666
        %v668 = vpop.f32.mrf.mxu0
        %669 = vmatprep.mubr.f32.mxu0 0.0
        %670 = vmatmul.mubr.f32.gmra.mxu0 %v348
        %v671 = vpop.f32.mrf.mxu0
        %v672 = vadd.f32 0.0, %v671
        %v673 = vpop.f32.mrf.mxu0
        %674 = vmatprep.mubr.f32.mxu0 0.0
        %675 = vmatmul.mubr.f32.gmra.mxu0 %v349
        %v676 = vpop.f32.mrf.mxu0
        %v677 = vadd.f32 0.0, %v676
        %v678 = vpop.f32.mrf.mxu0
        %679 = vmatprep.mubr.f32.mxu0 0.0
        %680 = vmatmul.mubr.f32.gmra.mxu0 %v350
        %v681 = vpop.f32.mrf.mxu0
        %v682 = vadd.f32 0.0, %v681
        %v683 = vpop.f32.mrf.mxu0
        %684 = vmatprep.mubr.f32.mxu0 0.0
        %685 = vmatmul.mubr.f32.gmra.mxu0 %v351
        %v686 = vpop.f32.mrf.mxu0
        %v687 = vadd.f32 0.0, %v686
        %v688 = vpop.f32.mrf.mxu0
        %689 = vdwg.mxu0
        %690 = vst [vmem:[%s324] sm:$0xff] %v612
        %691 = vst [vmem:[%s324 + $0x8] sm:$0xff] %v617
        %692 = vst [vmem:[%s324 + $0x10] sm:$0xff] %v622
        %693 = vst [vmem:[%s324 + $0x18] sm:$0xff] %v627
        %694 = vst [vmem:[%s324 + $0x20] sm:$0xff] %v632
        %695 = vst [vmem:[%s324 + $0x28] sm:$0xff] %v637
        %696 = vst [vmem:[%s324 + $0x30] sm:$0xff] %v642
        %697 = vst [vmem:[%s324 + $0x38] sm:$0xff] %v647
        %698 = vst [vmem:[%s324 + $0x40] sm:$0xff] %v652
        %699 = vst [vmem:[%s324 + $0x48] sm:$0xff] %v657
        %700 = vst [vmem:[%s324 + $0x50] sm:$0xff] %v662
        %701 = vst [vmem:[%s324 + $0x58] sm:$0xff] %v667
        %702 = vst [vmem:[%s324 + $0x60] sm:$0xff] %v672
        %703 = vst [vmem:[%s324 + $0x68] sm:$0xff] %v677
        %704 = vst [vmem:[%s324 + $0x70] sm:$0xff] %v682
        %705 = vst [vmem:[%s324 + $0x78] sm:$0xff] %v687
        %v706 = vld [vmem:[#allocation8] sm:$0xff]
        %v707 = vld [vmem:[#allocation8 + $0x8] sm:$0xff]
        %v708 = vld [vmem:[#allocation8 + $0x10] sm:$0xff]
        %v709 = vld [vmem:[#allocation8 + $0x18] sm:$0xff]
        %v710 = vld [vmem:[#allocation8 + $0x20] sm:$0xff]
        %v711 = vld [vmem:[#allocation8 + $0x28] sm:$0xff]
        %v712 = vld [vmem:[#allocation8 + $0x30] sm:$0xff]
        %v713 = vld [vmem:[#allocation8 + $0x38] sm:$0xff]
        %v714 = vld [vmem:[#allocation8 + $0x40] sm:$0xff]
        %v715 = vld [vmem:[#allocation8 + $0x48] sm:$0xff]
        %v716 = vld [vmem:[#allocation8 + $0x50] sm:$0xff]
        %v717 = vld [vmem:[#allocation8 + $0x58] sm:$0xff]
        %v718 = vld [vmem:[#allocation8 + $0x60] sm:$0xff]
        %v719 = vld [vmem:[#allocation8 + $0x68] sm:$0xff]
        %v720 = vld [vmem:[#allocation8 + $0x70] sm:$0xff]
        %v721 = vld [vmem:[#allocation8 + $0x78] sm:$0xff]
        %722 = vmatprep.subr.mxu0 0.0
        %723 = vmatpush1.msra.mxu0 %v721
        %724 = vmatprep.subr.mxu0 0.0
        %725 = vmatpush1.msra.mxu0 %v720
        %726 = vmatprep.subr.mxu0 0.0
        %727 = vmatpush1.msra.mxu0 %v719
        %728 = vmatprep.subr.mxu0 0.0
        %729 = vmatpush1.msra.mxu0 %v718
        %730 = vmatprep.subr.mxu0 0.0
        %731 = vmatpush1.msra.mxu0 %v717
        %732 = vmatprep.subr.mxu0 0.0
        %733 = vmatpush1.msra.mxu0 %v716
        %734 = vmatprep.subr.mxu0 0.0
        %735 = vmatpush1.msra.mxu0 %v715
        %736 = vmatprep.subr.mxu0 0.0
        %737 = vmatpush1.msra.mxu0 %v714
        %738 = vmatprep.subr.mxu0 0.0
        %739 = vmatpush1.msra.mxu0 %v713
        %740 = vmatprep.subr.mxu0 0.0
        %741 = vmatpush1.msra.mxu0 %v712
        %742 = vmatprep.subr.mxu0 0.0
        %743 = vmatpush1.msra.mxu0 %v711
        %744 = vmatprep.subr.mxu0 0.0
        %745 = vmatpush1.msra.mxu0 %v710
        %746 = vmatprep.subr.mxu0 0.0
        %747 = vmatpush1.msra.mxu0 %v709
        %748 = vmatprep.subr.mxu0 0.0
        %749 = vmatpush1.msra.mxu0 %v708
        %750 = vmatprep.subr.mxu0 0.0
        %751 = vmatpush1.msra.mxu0 %v707
        %752 = vmatprep.subr.mxu0 0.0
        %753 = vmatpush1.msra.mxu0 %v706
        %754 = vmatprep.subr.mxu0 0.0
        %755 = vmatpush2.msra.mxu0 0.0
        %756 = vmatprep.subr.mxu0 0.0
        %757 = vmatpush2.msra.mxu0 0.0
        %758 = vmatprep.subr.mxu0 0.0
        %759 = vmatpush2.msra.mxu0 0.0
        %760 = vmatprep.subr.mxu0 0.0
        %761 = vmatpush2.msra.mxu0 0.0
        %762 = vmatprep.subr.mxu0 0.0
        %763 = vmatpush2.msra.mxu0 0.0
        %764 = vmatprep.subr.mxu0 0.0
        %765 = vmatpush2.msra.mxu0 0.0
        %766 = vmatprep.subr.mxu0 0.0
        %767 = vmatpush2.msra.mxu0 0.0
        %768 = vmatprep.subr.mxu0 0.0
        %769 = vmatpush2.msra.mxu0 0.0
        %770 = vmatprep.subr.mxu0 0.0
        %771 = vmatpush2.msra.mxu0 0.0
        %772 = vmatprep.subr.mxu0 0.0
        %773 = vmatpush2.msra.mxu0 0.0
        %774 = vmatprep.subr.mxu0 0.0
        %775 = vmatpush2.msra.mxu0 0.0
        %776 = vmatprep.subr.mxu0 0.0
        %777 = vmatpush2.msra.mxu0 0.0
        %778 = vmatprep.subr.mxu0 0.0
        %779 = vmatpush2.msra.mxu0 0.0
        %780 = vmatprep.subr.mxu0 0.0
        %781 = vmatpush2.msra.mxu0 0.0
        %782 = vmatprep.subr.mxu0 0.0
        %783 = vmatpush2.msra.mxu0 0.0
        %784 = vmatprep.subr.mxu0 0.0
        %785 = vmatpush2.msra.mxu0 0.0
        %786 = vmatprep.mubr.f32.mxu0 0.0
        %787 = vmatmul.mubr.f32.gmra.mxu0 %v336
        %v788 = vpop.f32.mrf.mxu0
        %v789 = vadd.f32 0.0, %v788
        %v790 = vpop.f32.mrf.mxu0
        %791 = vmatprep.mubr.f32.mxu0 0.0
        %792 = vmatmul.mubr.f32.gmra.mxu0 %v337
        %v793 = vpop.f32.mrf.mxu0
        %v794 = vadd.f32 0.0, %v793
        %v795 = vpop.f32.mrf.mxu0
        %796 = vmatprep.mubr.f32.mxu0 0.0
        %797 = vmatmul.mubr.f32.gmra.mxu0 %v338
        %v798 = vpop.f32.mrf.mxu0
        %v799 = vadd.f32 0.0, %v798
        %v800 = vpop.f32.mrf.mxu0
        %801 = vmatprep.mubr.f32.mxu0 0.0
        %802 = vmatmul.mubr.f32.gmra.mxu0 %v339
        %v803 = vpop.f32.mrf.mxu0
        %v804 = vadd.f32 0.0, %v803
        %v805 = vpop.f32.mrf.mxu0
        %806 = vmatprep.mubr.f32.mxu0 0.0
        %807 = vmatmul.mubr.f32.gmra.mxu0 %v340
        %v808 = vpop.f32.mrf.mxu0
        %v809 = vadd.f32 0.0, %v808
        %v810 = vpop.f32.mrf.mxu0
        %811 = vmatprep.mubr.f32.mxu0 0.0
        %812 = vmatmul.mubr.f32.gmra.mxu0 %v341
        %v813 = vpop.f32.mrf.mxu0
        %v814 = vadd.f32 0.0, %v813
        %v815 = vpop.f32.mrf.mxu0
        %816 = vmatprep.mubr.f32.mxu0 0.0
        %817 = vmatmul.mubr.f32.gmra.mxu0 %v342
        %v818 = vpop.f32.mrf.mxu0
        %v819 = vadd.f32 0.0, %v818
        %v820 = vpop.f32.mrf.mxu0
        %821 = vmatprep.mubr.f32.mxu0 0.0
        %822 = vmatmul.mubr.f32.gmra.mxu0 %v343
        %v823 = vpop.f32.mrf.mxu0
        %v824 = vadd.f32 0.0, %v823
        %v825 = vpop.f32.mrf.mxu0
        %826 = vmatprep.mubr.f32.mxu0 0.0
        %827 = vmatmul.mubr.f32.gmra.mxu0 %v344
        %v828 = vpop.f32.mrf.mxu0
        %v829 = vadd.f32 0.0, %v828
        %v830 = vpop.f32.mrf.mxu0
        %831 = vmatprep.mubr.f32.mxu0 0.0
        %832 = vmatmul.mubr.f32.gmra.mxu0 %v345
        %v833 = vpop.f32.mrf.mxu0
        %v834 = vadd.f32 0.0, %v833
        %v835 = vpop.f32.mrf.mxu0
        %836 = vmatprep.mubr.f32.mxu0 0.0
        %837 = vmatmul.mubr.f32.gmra.mxu0 %v346
        %v838 = vpop.f32.mrf.mxu0
        %v839 = vadd.f32 0.0, %v838
        %v840 = vpop.f32.mrf.mxu0
        %841 = vmatprep.mubr.f32.mxu0 0.0
        %842 = vmatmul.mubr.f32.gmra.mxu0 %v347
        %v843 = vpop.f32.mrf.mxu0
        %v844 = vadd.f32 0.0, %v843
        %v845 = vpop.f32.mrf.mxu0
        %846 = vmatprep.mubr.f32.mxu0 0.0
        %847 = vmatmul.mubr.f32.gmra.mxu0 %v348
        %v848 = vpop.f32.mrf.mxu0
        %v849 = vadd.f32 0.0, %v848
        %v850 = vpop.f32.mrf.mxu0
        %851 = vmatprep.mubr.f32.mxu0 0.0
        %852 = vmatmul.mubr.f32.gmra.mxu0 %v349
        %v853 = vpop.f32.mrf.mxu0
        %v854 = vadd.f32 0.0, %v853
        %v855 = vpop.f32.mrf.mxu0
        %856 = vmatprep.mubr.f32.mxu0 0.0
        %857 = vmatmul.mubr.f32.gmra.mxu0 %v350
        %v858 = vpop.f32.mrf.mxu0
        %v859 = vadd.f32 0.0, %v858
        %v860 = vpop.f32.mrf.mxu0
        %861 = vmatprep.mubr.f32.mxu0 0.0
        %862 = vmatmul.mubr.f32.gmra.mxu0 %v351
        %v863 = vpop.f32.mrf.mxu0
        %v864 = vadd.f32 0.0, %v863
        %v865 = vpop.f32.mrf.mxu0
        %866 = vdwg.mxu0
        %867 = vst [vmem:[%s331] sm:$0xff] %v789
        %868 = vst [vmem:[%s331 + $0x8] sm:$0xff] %v794
        %869 = vst [vmem:[%s331 + $0x10] sm:$0xff] %v799
        %870 = vst [vmem:[%s331 + $0x18] sm:$0xff] %v804
        %871 = vst [vmem:[%s331 + $0x20] sm:$0xff] %v809
        %872 = vst [vmem:[%s331 + $0x28] sm:$0xff] %v814
        %873 = vst [vmem:[%s331 + $0x30] sm:$0xff] %v819
        %874 = vst [vmem:[%s331 + $0x38] sm:$0xff] %v824
        %875 = vst [vmem:[%s331 + $0x40] sm:$0xff] %v829
        %876 = vst [vmem:[%s331 + $0x48] sm:$0xff] %v834
        %877 = vst [vmem:[%s331 + $0x50] sm:$0xff] %v839
        %878 = vst [vmem:[%s331 + $0x58] sm:$0xff] %v844
        %879 = vst [vmem:[%s331 + $0x60] sm:$0xff] %v849
        %880 = vst [vmem:[%s331 + $0x68] sm:$0xff] %v854
        %881 = vst [vmem:[%s331 + $0x70] sm:$0xff] %v859
        %882 = vst [vmem:[%s331 + $0x78] sm:$0xff] %v864
        %s883 = sand.u32 %s126, 1
        %s884 = scalar_lea.sflag [#allocation4], %s883
        %s885 = sand.u32 %s126, 1
        %s886 = smul.addr %s885, 128
        %s887 = scalar_lea.vmem [#allocation10], %s886
        %s888 = sand.u32 %s29, 1
        %s889 = scalar_lea.sflag [#allocation12], %s888
        %s890 = sand.u32 %s152, 1
        %s891 = smul.addr %s890, 128
        %s892 = scalar_lea.vmem [#allocation11], %s891
        %s893 = sand.u32 %s29, 1
        %s894 = scalar_lea.sflag [#allocation12], %s893
        %s895 = sand.u32 %s178, 1
        %s896 = smul.addr %s895, 128
        %s897 = scalar_lea.vmem [#allocation13], %s896
        // Predicated region
        $region53: #{tpu_custom_call.1} parent=35 // pred_check
          %p898 = pneg %p136
        $region54: #{tpu_custom_call.1} parent=35 // pred_check_branch
          %900 = sbr.rel (%p898) target = $region56
        $region55: #{tpu_custom_call.1} parent=35 // pred_region
          %s901 = smul.u32 16, %s29
          %s903 = ssub.s32 2048, 2048
          %904 = vsyncadd %s884, %s903
          %s905 = smul.addr %s901, 128
          %s906 = scalar_lea.hbm %s4, %s905
          %s907 = sshll.u32 %s887, 4
          %s908 = int_to_ptr.vmem [resolvable:$true] %s907
          %913 = dma.vmem_to_hbm [thread:$0]  %s908, 2048, %s906, %s884, 128, 128, 8
        $region56: #{tpu_custom_call.1} parent=35 // pred_fallthru
          _
        // Predicated region
        $region57: #{tpu_custom_call.1} parent=35 // pred_check
          %p914 = pneg %p162
        $region58: #{tpu_custom_call.1} parent=35 // pred_check_branch
          %916 = sbr.rel (%p914) target = $region60
        $region59: #{tpu_custom_call.1} parent=35 // pred_region
          %s917 = smul.u32 16, %s29
          %s919 = ssub.s32 2048, 2048
          %920 = vsyncadd %s889, %s919
          %s921 = smul.addr %s917, 128
          %s922 = scalar_lea.hbm %s5, %s921
          %s923 = sshll.u32 %s892, 4
          %s924 = int_to_ptr.vmem [resolvable:$true] %s923
          %929 = dma.vmem_to_hbm [thread:$0]  %s924, 2048, %s922, %s889, 128, 128, 8
        $region60: #{tpu_custom_call.1} parent=35 // pred_fallthru
          _
        // Predicated region
        $region61: #{tpu_custom_call.1} parent=35 // pred_check
          %p930 = pneg %p188
        $region62: #{tpu_custom_call.1} parent=35 // pred_check_branch
          %932 = sbr.rel (%p930) target = $region64
        $region63: #{tpu_custom_call.1} parent=35 // pred_region
          %s933 = smul.u32 16, %s29
          %s935 = ssub.s32 2048, 2048
          %936 = vsyncadd %s894, %s935
          %s937 = smul.addr %s933, 128
          %s938 = scalar_lea.hbm %s6, %s937
          %s939 = sshll.u32 %s897, 4
          %s940 = int_to_ptr.vmem [resolvable:$true] %s939
          %945 = dma.vmem_to_hbm [thread:$0]  %s940, 2048, %s938, %s894, 128, 128, 8
        $region64: #{tpu_custom_call.1} parent=35 // pred_fallthru
          _
      $region36: #{tpu_custom_call.1} parent=5 // pred_fallthru
        _
      %p946 = scmp.le.s32.totalorder 2, %s24
      // Predicated region
      $region65: #{tpu_custom_call.1} parent=5 // pred_check
        %p947 = pneg %p946
      $region66: #{tpu_custom_call.1} parent=5 // pred_check_branch
        %949 = sbr.rel (%p947) target = $region68
      $region67: #{tpu_custom_call.1} parent=5 // pred_region
        %s950 = ssub.s32 %s24, 2
        // Predicated region
        $region69: #{tpu_custom_call.1} parent=67 // pred_check
          %p951 = pneg %p142
        $region70: #{tpu_custom_call.1} parent=67 // pred_check_branch
          %953 = sbr.rel (%p951) target = $region72
        $region71: #{tpu_custom_call.1} parent=67 // pred_region
          %s954 = sand.u32 %s127, 1
          %s955 = scalar_lea.sflag [#allocation4], %s954
          %s956 = sand.u32 %s127, 1
          %s957 = smul.addr %s956, 128
          %s958 = scalar_lea.vmem [#allocation10], %s957
          %959 = dma.done %s955, 2048
        $region72: #{tpu_custom_call.1} parent=67 // pred_fallthru
          _
        // Predicated region
        $region73: #{tpu_custom_call.1} parent=67 // pred_check
          %p960 = pneg %p168
        $region74: #{tpu_custom_call.1} parent=67 // pred_check_branch
          %962 = sbr.rel (%p960) target = $region76
        $region75: #{tpu_custom_call.1} parent=67 // pred_region
          %s963 = sand.u32 %s30, 1
          %s964 = scalar_lea.sflag [#allocation12], %s963
          %s965 = sand.u32 %s153, 1
          %s966 = smul.addr %s965, 128
          %s967 = scalar_lea.vmem [#allocation11], %s966
          %968 = dma.done %s964, 2048
        $region76: #{tpu_custom_call.1} parent=67 // pred_fallthru
          _
        // Predicated region
        $region77: #{tpu_custom_call.1} parent=67 // pred_check
          %p969 = pneg %p194
        $region78: #{tpu_custom_call.1} parent=67 // pred_check_branch
          %971 = sbr.rel (%p969) target = $region80
        $region79: #{tpu_custom_call.1} parent=67 // pred_region
          %s972 = sand.u32 %s30, 1
          %s973 = scalar_lea.sflag [#allocation12], %s972
          %s974 = sand.u32 %s179, 1
          %s975 = smul.addr %s974, 128
          %s976 = scalar_lea.vmem [#allocation13], %s975
          %977 = dma.done %s973, 2048
        $region80: #{tpu_custom_call.1} parent=67 // pred_fallthru
          _
      $region68: #{tpu_custom_call.1} parent=5 // pred_fallthru
        _
    $region6: #{tpu_custom_call.1} parent=1 // loop_footer
      %s28 = sadd.s32 1, %s24
    $region7: #{tpu_custom_call.1} parent=1 // loop_footer_branch
      %23 = sbr.rel target = $region3
    $region8: #{tpu_custom_call.1} parent=1 // loop_exit
      _
    %978 = vsyncpa [#allocation3], 1
    %s979 = scalar_lea.sflag [#allocation3], 1
    %980 = vsyncpa %s979, 1
    %981 = vsyncpa [#allocation6], 1
    %982 = vsyncpa [#allocation9], 1
    %983 = vsyncpa [#allocation4], 1
    %s984 = scalar_lea.sflag [#allocation4], 1
    %985 = vsyncpa %s984, 1
    %986 = vsyncpa [#allocation12], 1
    %s987 = scalar_lea.sflag [#allocation12], 1
    %988 = vsyncpa %s987, 1

</llo_original>
